<compile_context>
chip_gen: v7x
topology: tpu7x:2x2x1
jax: 0.10.0
libtpu: 0.0.40
codegen_flags: <defaults>
</compile_context>

<pallas_src>
import functools
import math

import jax
import jax.numpy as jnp
from jax.experimental import pallas as pl
from jax.experimental.pallas import tpu as pltpu

EPS = 1e-12                           # F.normalize default eps
CLAMP_MAX = math.log(1.0 / 0.01)      # torch.clamp(temperature, max=...)


def _round_up(v, m):
    return (v + m - 1) // m * m


def _cosine_gate_kernel(scale_ref, x_ref, w_ref, b_ref, sim_ref, out_ref):
    """One token tile of the cosine gate.

    proj   = x @ Wp + bp                          (MXU, f32 accumulate)
    inv    = rsqrt(max(sum(proj^2,-1), eps^2)) * logit_scale   (EUP)
    out    = (proj * inv) @ sim_n                 (MXU; sim_n pre-normalized)
    """
    proj = jnp.dot(x_ref[...], w_ref[...], preferred_element_type=jnp.float32)
    proj = proj + b_ref[...].astype(jnp.float32)

    # rsqrt(max(sumsq, EPS^2)) == 1 / max(norm, EPS)  -> matches F.normalize.
    sumsq = jnp.sum(proj * proj, axis=1, keepdims=True)
    inv = jax.lax.rsqrt(jnp.maximum(sumsq, EPS * EPS)) * scale_ref[0]
    proj_n = (proj * inv).astype(sim_ref.dtype)

    out_ref[...] = jnp.dot(
        proj_n, sim_ref[...], preferred_element_type=jnp.float32
    ).astype(out_ref.dtype)


@functools.partial(jax.jit, static_argnames=("top_k",))
def cosine_topk_gate(x, w_proj, b_proj, sim_matrix, temperature, *, top_k):
    n_tok, model_dim = x.shape
    proj_dim, num_experts = sim_matrix.shape

    # ---- token-independent work, hoisted out of the per-tile kernel body ----
    sim_f32 = sim_matrix.astype(jnp.float32)
    sim_norm = jnp.sqrt(jnp.sum(sim_f32 * sim_f32, axis=0, keepdims=True))
    sim_n = (sim_f32 / jnp.maximum(sim_norm, EPS)).astype(sim_matrix.dtype)
    logit_scale = jnp.exp(
        jnp.minimum(temperature.astype(jnp.float32), CLAMP_MAX)
    ).reshape((1,))

    # ---- padding for MXU / lane alignment ------------------------------------
    k_pad = _round_up(model_dim, 128)          # contraction dim of 1st matmul
    e_pad = _round_up(num_experts, 128)        # lane-dense output / MXU N dim
    tile_t = 256 if n_tok >= 256 else _round_up(n_tok, 8)
    t_pad = _round_up(n_tok, tile_t)

    x_p = jnp.pad(x, ((0, t_pad - n_tok), (0, k_pad - model_dim)))
    w_p = jnp.pad(w_proj, ((0, k_pad - model_dim), (0, 0)))
    sim_p = jnp.pad(sim_n, ((0, 0), (0, e_pad - num_experts)))

    logits_p = pl.pallas_call(
        _cosine_gate_kernel,
        out_shape=jax.ShapeDtypeStruct((t_pad, e_pad), jnp.float32),
        grid=(t_pad // tile_t,),
        in_specs=[
            pl.BlockSpec(memory_space=pltpu.SMEM),                # logit_scale (1,)
            pl.BlockSpec((tile_t, k_pad), lambda i: (i, 0)),      # x tile (streamed)
            pl.BlockSpec((k_pad, proj_dim), lambda i: (0, 0)),    # Wp (resident)
            pl.BlockSpec((1, proj_dim), lambda i: (0, 0)),        # bp (resident)
            pl.BlockSpec((proj_dim, e_pad), lambda i: (0, 0)),    # sim_n (resident)
        ],
        out_specs=pl.BlockSpec((tile_t, e_pad), lambda i: (i, 0)),
        compiler_params=pltpu.CompilerParams(
            dimension_semantics=("parallel",),
            vmem_limit_bytes=32 * 1024 * 1024,
        ),
    )(logit_scale, x_p, w_p, b_proj, sim_p)

    logits = logits_p[:n_tok, :num_experts]
    # TODO(synk): top_k is a static config value passed through (no expert
    # selection happens in the reference forward), matching the PyTorch module.
    return logits, top_k


def make_params(key, model_dim, num_global_experts, proj_dim=256, init_t=0.5):
    """Deterministic parameter init matching the PyTorch module's __init__."""
    k_w, k_b, k_sim = jax.random.split(key, 3)
    bound = 1.0 / math.sqrt(model_dim)
    # torch.nn.Linear default init: U(-1/sqrt(fan_in), 1/sqrt(fan_in))
    w_proj = jax.random.uniform(
        k_w, (model_dim, proj_dim), jnp.float32, minval=-bound, maxval=bound)
    b_proj = jax.random.uniform(
        k_b, (1, proj_dim), jnp.float32, minval=-bound, maxval=bound)
    # torch.nn.init.normal_(sim_matrix, 0, 0.01)
    sim_matrix = 0.01 * jax.random.normal(
        k_sim, (proj_dim, num_global_experts), jnp.float32)
    # temperature = log(1 / init_t)
    temperature = jnp.full((1,), math.log(1.0 / init_t), jnp.float32)
    return w_proj, b_proj, sim_matrix, temperature


if __name__ == "__main__":
    key = jax.random.PRNGKey(0)
    k_x, k_p = jax.random.split(key)

    # Small shapes: 8 tokens, model_dim=32, proj_dim=256, 4 experts, k=2.
    n_tokens, model_dim, proj_dim, num_experts, k = 8, 32, 256, 4, 2

    x = jax.random.normal(k_x, (n_tokens, model_dim), jnp.float32)
    w_proj, b_proj, sim_matrix, temperature = make_params(
        k_p, model_dim, num_experts, proj_dim=proj_dim, init_t=0.5)

    logits, top_k = cosine_topk_gate(
        x, w_proj, b_proj, sim_matrix, temperature,
        top_k=min(num_experts, k))
    logits = jax.block_until_ready(logits)

    # Pure-JAX reference check (same math, no Pallas).
    proj = x @ w_proj + b_proj
    proj_n = proj / jnp.maximum(
        jnp.linalg.norm(proj, axis=1, keepdims=True), EPS)
    sim_n = sim_matrix / jnp.maximum(
        jnp.linalg.norm(sim_matrix, axis=0, keepdims=True), EPS)
    ref = (proj_n @ sim_n) * jnp.exp(jnp.minimum(temperature[0], CLAMP_MAX))

    assert logits.shape == (n_tokens, num_experts)
    assert top_k == 2
    assert jnp.allclose(logits, ref, atol=1e-5, rtol=1e-5)
    print("KERNEL_OK")
</pallas_src>

<mosaic_0001>
module attributes {stable_mosaic.version = 11 : i64} {
  func.func @_cosine_gate_kernel(%arg0: i32, %arg1: memref<1xf32, #tpu.memory_space<smem>>, %arg2: memref<8x128xf32, #tpu.memory_space<vmem>>, %arg3: memref<128x256xf32, #tpu.memory_space<vmem>>, %arg4: memref<1x256xf32, #tpu.memory_space<vmem>>, %arg5: memref<256x128xf32, #tpu.memory_space<vmem>>, %arg6: memref<8x128xf32, #tpu.memory_space<vmem>>) attributes {dimension_semantics = [#tpu.dimension_semantics<parallel>], iteration_bounds = array<i64: 1>, scalar_prefetch = 0 : i64, scratch_operands = 0 : i64, tpu.core_type = #tpu.core_type<tc>, window_params = [{transform_indices = @transform_0, window_bounds = array<i64: 1>}, {transform_indices = @transform_1, window_bounds = array<i64: 8, 128>}, {pipeline_mode = #tpu.pipeline_mode<synchronous>, transform_indices = @transform_2, window_bounds = array<i64: 128, 256>}, {pipeline_mode = #tpu.pipeline_mode<synchronous>, transform_indices = @transform_3, window_bounds = array<i64: 1, 256>}, {pipeline_mode = #tpu.pipeline_mode<synchronous>, transform_indices = @transform_4, window_bounds = array<i64: 256, 128>}, {transform_indices = @transform_5, window_bounds = array<i64: 8, 128>}]} {
    %c0 = arith.constant 0 : index
    %c0_0 = arith.constant 0 : index
    %0 = vector.load %arg2[%c0, %c0_0] : memref<8x128xf32, #tpu.memory_space<vmem>>, vector<8x128xf32>
    %c0_1 = arith.constant 0 : index
    %c0_2 = arith.constant 0 : index
    %1 = vector.load %arg3[%c0_1, %c0_2] : memref<128x256xf32, #tpu.memory_space<vmem>>, vector<128x256xf32>
    %cst = arith.constant dense<0.000000e+00> : vector<8x256xf32>
    %2 = tpu.matmul %0, %1, %cst {dimension_numbers = #tpu.dot_dimension_numbers<[1], [0], [0], [1], [0, 0, 1, 1], [], []>} : vector<8x128xf32>, vector<128x256xf32>, vector<8x256xf32> -> vector<8x256xf32>
    %c0_3 = arith.constant 0 : index
    %c0_4 = arith.constant 0 : index
    %3 = vector.load %arg4[%c0_3, %c0_4] : memref<1x256xf32, #tpu.memory_space<vmem>>, vector<1x256xf32>
    %4 = vector.broadcast %3 : vector<1x256xf32> to vector<8x256xf32>
    %5 = arith.addf %2, %4 : vector<8x256xf32>
    %6 = arith.mulf %5, %5 : vector<8x256xf32>
    %cst_5 = arith.constant dense<0.000000e+00> : vector<8xf32>
    %7 = vector.multi_reduction <add>, %6, %cst_5 [1] : vector<8x256xf32> to vector<8xf32>
    %8 = vector.shape_cast %7 : vector<8xf32> to vector<8x1xf32>
    %cst_6 = arith.constant 1.000000e-24 : f32
    %9 = vector.broadcast %cst_6 : f32 to vector<8x1xf32>
    %10 = arith.maximumf %8, %9 : vector<8x1xf32>
    %11 = math.rsqrt %10 : vector<8x1xf32>
    %c0_7 = arith.constant 0 : index
    %12 = memref.load %arg1[%c0_7] : memref<1xf32, #tpu.memory_space<smem>>
    %13 = vector.broadcast %12 : f32 to vector<8x1xf32>
    %14 = arith.mulf %11, %13 : vector<8x1xf32>
    %15 = vector.broadcast %14 : vector<8x1xf32> to vector<8x256xf32>
    %16 = arith.mulf %5, %15 : vector<8x256xf32>
    %c0_8 = arith.constant 0 : index
    %c0_9 = arith.constant 0 : index
    %17 = vector.load %arg5[%c0_8, %c0_9] : memref<256x128xf32, #tpu.memory_space<vmem>>, vector<256x128xf32>
    %cst_10 = arith.constant dense<0.000000e+00> : vector<8x128xf32>
    %18 = tpu.matmul %16, %17, %cst_10 {dimension_numbers = #tpu.dot_dimension_numbers<[1], [0], [0], [1], [0, 0, 1, 1], [], []>} : vector<8x256xf32>, vector<256x128xf32>, vector<8x128xf32> -> vector<8x128xf32>
    %c0_11 = arith.constant 0 : index
    %c0_12 = arith.constant 0 : index
    %19 = vector.load %arg6[%c0_11, %c0_12] : memref<8x128xf32, #tpu.memory_space<vmem>>, vector<8x128xf32>
    tpu.vector_store %arg6[%c0_11, %c0_12], %18 {strides = array<i32>} : memref<8x128xf32, #tpu.memory_space<vmem>>, vector<8x128xf32>,
    return
  }
  func.func @transform_0(%arg0: i32) -> i32 {
    %c0_i32 = arith.constant 0 : i32
    %c0_i32_0 = arith.constant 0 : i32
    return %c0_i32 : i32
  }
  func.func @transform_1(%arg0: i32) -> (i32, i32) {
    %c0_i32 = arith.constant 0 : i32
    %c0_i32_0 = arith.constant 0 : i32
    return %arg0, %c0_i32 : i32, i32
  }
  func.func @transform_2(%arg0: i32) -> (i32, i32) {
    %c0_i32 = arith.constant 0 : i32
    %c0_i32_0 = arith.constant 0 : i32
    %c0_i32_1 = arith.constant 0 : i32
    return %c0_i32, %c0_i32_0 : i32, i32
  }
  func.func @transform_3(%arg0: i32) -> (i32, i32) {
    %c0_i32 = arith.constant 0 : i32
    %c0_i32_0 = arith.constant 0 : i32
    %c0_i32_1 = arith.constant 0 : i32
    return %c0_i32, %c0_i32_0 : i32, i32
  }
  func.func @transform_4(%arg0: i32) -> (i32, i32) {
    %c0_i32 = arith.constant 0 : i32
    %c0_i32_0 = arith.constant 0 : i32
    %c0_i32_1 = arith.constant 0 : i32
    return %c0_i32, %c0_i32_0 : i32, i32
  }
  func.func @transform_5(%arg0: i32) -> (i32, i32) {
    %c0_i32 = arith.constant 0 : i32
    %c0_i32_0 = arith.constant 0 : i32
    return %arg0, %c0_i32 : i32, i32
  }
}

</mosaic_0001>

<llo_original>
// kernel: cosine_topk_gate.1
$region0: #{cosine_topk_gate.1}
  #allocation0 [shape = 'u32[]', space=smem, size = 0x4, offset = 0x4, fixed_abs, tag = 'smem constant byte address 0x4 - core index']
  #allocation1 [shape = 'u32[144,128]{1,0:T(1,128)}', space=vmem, size = 0x12000, scoped, tag = 'internal scratch']
  #allocation2 [shape = 'f32[1]{0:T(128)S(6)}', space=smem, size = 0x200, scoped, tag = 'scoped memory for cosine_topk_gate.1']
  %s0 = inlined_call_operand.<no memory space> [shape: f32[1], index: 0, kind: input, shape index: {}]
  %s1 = inlined_call_operand.vmem [shape: f32[8,128], index: 1, kind: input, shape index: {}]
  %s2 = inlined_call_operand.vmem [shape: f32[128,256], index: 2, kind: input, shape index: {}]
  %s3 = inlined_call_operand.vmem [shape: f32[1,256], index: 3, kind: input, shape index: {}]
  %s4 = inlined_call_operand.vmem [shape: f32[256,128], index: 4, kind: input, shape index: {}]
  %s5 = inlined_call_operand.vmem [shape: f32[8,128], index: 5, kind: output, shape index: {}]
  %s6 = sld [smem:[#allocation0]]
  $region30: #{cosine_topk_gate.1} parent=0
    _
  %s8 = ssub.s32 1, %s6
  %s9 = scalar_select 0, %s8, %s6
  %10 = sst [smem:[#allocation2]] %s0
  // Predicated region
  $region2: #{cosine_topk_gate.1} parent=0 // pred_check
    _
  $region3: #{cosine_topk_gate.1} parent=0 // pred_check_branch
    %12 = sbr.rel (0) target = $region5
  $region4: #{cosine_topk_gate.1} parent=0 // pred_region
    _
  $region5: #{cosine_topk_gate.1} parent=0 // pred_fallthru
    _
  // Predicated region
  $region6: #{cosine_topk_gate.1} parent=0 // pred_check
    _
  $region7: #{cosine_topk_gate.1} parent=0 // pred_check_branch
    %14 = sbr.rel (0) target = $region9
  $region8: #{cosine_topk_gate.1} parent=0 // pred_region
    _
  $region9: #{cosine_topk_gate.1} parent=0 // pred_fallthru
    _
  // Predicated region
  $region10: #{cosine_topk_gate.1} parent=0 // pred_check
    _
  $region11: #{cosine_topk_gate.1} parent=0 // pred_check_branch
    %16 = sbr.rel (0) target = $region13
  $region12: #{cosine_topk_gate.1} parent=0 // pred_region
    _
  $region13: #{cosine_topk_gate.1} parent=0 // pred_fallthru
    _
  // Predicated region
  $region14: #{cosine_topk_gate.1} parent=0 // pred_check
    _
  $region15: #{cosine_topk_gate.1} parent=0 // pred_check_branch
    %18 = sbr.rel (0) target = $region17
  $region16: #{cosine_topk_gate.1} parent=0 // pred_region
    _
  $region17: #{cosine_topk_gate.1} parent=0 // pred_fallthru
    _
  // Predicated region
  $region18: #{cosine_topk_gate.1} parent=0 // pred_check
    _
  $region19: #{cosine_topk_gate.1} parent=0 // pred_check_branch
    %20 = sbr.rel (0) target = $region21
  $region20: #{cosine_topk_gate.1} parent=0 // pred_region
    _
  $region21: #{cosine_topk_gate.1} parent=0 // pred_fallthru
    _
  %v21 = vld [vmem:[%s1] sm:$0xff]
  %v22 = vld [vmem:[%s2] sm:$0xff]
  %v23 = vld [vmem:[%s2 + $0x8] sm:$0xff]
  %v24 = vld [vmem:[%s2 + $0x10] sm:$0xff]
  %v25 = vld [vmem:[%s2 + $0x18] sm:$0xff]
  %v26 = vld [vmem:[%s2 + $0x20] sm:$0xff]
  %v27 = vld [vmem:[%s2 + $0x28] sm:$0xff]
  %v28 = vld [vmem:[%s2 + $0x30] sm:$0xff]
  %v29 = vld [vmem:[%s2 + $0x38] sm:$0xff]
  %v30 = vld [vmem:[%s2 + $0x40] sm:$0xff]
  %v31 = vld [vmem:[%s2 + $0x48] sm:$0xff]
  %v32 = vld [vmem:[%s2 + $0x50] sm:$0xff]
  %v33 = vld [vmem:[%s2 + $0x58] sm:$0xff]
  %v34 = vld [vmem:[%s2 + $0x60] sm:$0xff]
  %v35 = vld [vmem:[%s2 + $0x68] sm:$0xff]
  %v36 = vld [vmem:[%s2 + $0x70] sm:$0xff]
  %v37 = vld [vmem:[%s2 + $0x78] sm:$0xff]
  %v38 = vld [vmem:[%s2 + $0x80] sm:$0xff]
  %v39 = vld [vmem:[%s2 + $0x88] sm:$0xff]
  %v40 = vld [vmem:[%s2 + $0x90] sm:$0xff]
  %v41 = vld [vmem:[%s2 + $0x98] sm:$0xff]
  %v42 = vld [vmem:[%s2 + $0xa0] sm:$0xff]
  %v43 = vld [vmem:[%s2 + $0xa8] sm:$0xff]
  %v44 = vld [vmem:[%s2 + $0xb0] sm:$0xff]
  %v45 = vld [vmem:[%s2 + $0xb8] sm:$0xff]
  %v46 = vld [vmem:[%s2 + $0xc0] sm:$0xff]
  %v47 = vld [vmem:[%s2 + $0xc8] sm:$0xff]
  %v48 = vld [vmem:[%s2 + $0xd0] sm:$0xff]
  %v49 = vld [vmem:[%s2 + $0xd8] sm:$0xff]
  %v50 = vld [vmem:[%s2 + $0xe0] sm:$0xff]
  %v51 = vld [vmem:[%s2 + $0xe8] sm:$0xff]
  %v52 = vld [vmem:[%s2 + $0xf0] sm:$0xff]
  %v53 = vld [vmem:[%s2 + $0xf8] sm:$0xff]
  %v54 = vld [vmem:[%s3] sm:$0x3]
  %v56 = vlaneseq
  %v57 = vshrl.u32 %v56, 7
  %v58 = vsub.s32 0, %v57
  %v59 = vrot.slane %v54, %v58
  %v60 = vlaneseq
  %v61 = vshrl.u32 %v60, 7
  %v62 = vsub.s32 1, %v61
  %v63 = vrot.slane %v54, %v62
  %66 = vmatprep.subr.mxu0 %v23
  %67 = vmatpush1.msra.mxu0 %v22
  %68 = vmatprep.subr.mxu0 %v25
  %69 = vmatpush1.msra.mxu0 %v24
  %70 = vmatprep.subr.mxu0 %v27
  %71 = vmatpush1.msra.mxu0 %v26
  %72 = vmatprep.subr.mxu0 %v29
  %73 = vmatpush1.msra.mxu0 %v28
  %74 = vmatprep.subr.mxu0 %v31
  %75 = vmatpush1.msra.mxu0 %v30
  %76 = vmatprep.subr.mxu0 %v33
  %77 = vmatpush1.msra.mxu0 %v32
  %78 = vmatprep.subr.mxu0 %v35
  %79 = vmatpush1.msra.mxu0 %v34
  %80 = vmatprep.subr.mxu0 %v37
  %81 = vmatpush1.msra.mxu0 %v36
  %82 = vmatprep.subr.mxu0 %v39
  %83 = vmatpush1.msra.mxu0 %v38
  %84 = vmatprep.subr.mxu0 %v41
  %85 = vmatpush1.msra.mxu0 %v40
  %86 = vmatprep.subr.mxu0 %v43
  %87 = vmatpush1.msra.mxu0 %v42
  %88 = vmatprep.subr.mxu0 %v45
  %89 = vmatpush1.msra.mxu0 %v44
  %90 = vmatprep.subr.mxu0 %v47
  %91 = vmatpush1.msra.mxu0 %v46
  %92 = vmatprep.subr.mxu0 %v49
  %93 = vmatpush1.msra.mxu0 %v48
  %94 = vmatprep.subr.mxu0 %v51
  %95 = vmatpush1.msra.mxu0 %v50
  %96 = vmatprep.subr.mxu0 %v53
  %97 = vmatpush1.msra.mxu0 %v52
  %98 = vmatprep.subr.mxu0 0.0
  %99 = vmatpush1.msra.mxu0 0.0
  %100 = vmatprep.subr.mxu0 0.0
  %101 = vmatpush1.msra.mxu0 0.0
  %102 = vmatprep.subr.mxu0 0.0
  %103 = vmatpush1.msra.mxu0 0.0
  %104 = vmatprep.subr.mxu0 0.0
  %105 = vmatpush1.msra.mxu0 0.0
  %106 = vmatprep.subr.mxu0 0.0
  %107 = vmatpush1.msra.mxu0 0.0
  %108 = vmatprep.subr.mxu0 0.0
  %109 = vmatpush1.msra.mxu0 0.0
  %110 = vmatprep.subr.mxu0 0.0
  %111 = vmatpush1.msra.mxu0 0.0
  %112 = vmatprep.subr.mxu0 0.0
  %113 = vmatpush1.msra.mxu0 0.0
  %114 = vmatprep.subr.mxu0 0.0
  %115 = vmatpush1.msra.mxu0 0.0
  %116 = vmatprep.subr.mxu0 0.0
  %117 = vmatpush1.msra.mxu0 0.0
  %118 = vmatprep.subr.mxu0 0.0
  %119 = vmatpush1.msra.mxu0 0.0
  %120 = vmatprep.subr.mxu0 0.0
  %121 = vmatpush1.msra.mxu0 0.0
  %122 = vmatprep.subr.mxu0 0.0
  %123 = vmatpush1.msra.mxu0 0.0
  %124 = vmatprep.subr.mxu0 0.0
  %125 = vmatpush1.msra.mxu0 0.0
  %126 = vmatprep.subr.mxu0 0.0
  %127 = vmatpush1.msra.mxu0 0.0
  %128 = vmatprep.subr.mxu0 0.0
  %129 = vmatpush1.msra.mxu0 0.0
  %130 = vmatprep.mubr.f32.mxu0 0.0
  %131 = vmatmul.mubr.f32.gmra.mrb[0].mxu0 %v21
  %v132 = vpop.f32.mrb[0].mxu0
  %v133 = vadd.f32 %v59, %v132
  %v134 = vpop.f32.mrb[0].mxu0
  %v135 = vadd.f32 %v63, %v134
  %136 = vdwg.mxu0
  %v137 = vmul.f32 %v133, %v133
  %v138 = vmul.f32 %v135, %v135
  %v139 = vadd.f32 %v137, %v138
  %140 = vadd.xlane.f32.xlu0 %v139
  %v141 = vpop.xlane.xlu0 %140
  %v142 = vmax.f32 %v141, 1e-24
  %v143 = vrsqrt.pop %v142
  %s144 = sld [smem:[#allocation2]]
  %v145 = vstv %s144
  %v146 = vmul.f32 %v143, %v145
  %v147 = vmul.f32 %v133, %v146
  %v148 = vmul.f32 %v135, %v146
  %v149 = vld [vmem:[%s4] sm:$0xff]
  %v150 = vld [vmem:[%s4 + $0x8] sm:$0xff]
  %v151 = vld [vmem:[%s4 + $0x10] sm:$0xff]
  %v152 = vld [vmem:[%s4 + $0x18] sm:$0xff]
  %v153 = vld [vmem:[%s4 + $0x20] sm:$0xff]
  %v154 = vld [vmem:[%s4 + $0x28] sm:$0xff]
  %v155 = vld [vmem:[%s4 + $0x30] sm:$0xff]
  %v156 = vld [vmem:[%s4 + $0x38] sm:$0xff]
  %v157 = vld [vmem:[%s4 + $0x40] sm:$0xff]
  %v158 = vld [vmem:[%s4 + $0x48] sm:$0xff]
  %v159 = vld [vmem:[%s4 + $0x50] sm:$0xff]
  %v160 = vld [vmem:[%s4 + $0x58] sm:$0xff]
  %v161 = vld [vmem:[%s4 + $0x60] sm:$0xff]
  %v162 = vld [vmem:[%s4 + $0x68] sm:$0xff]
  %v163 = vld [vmem:[%s4 + $0x70] sm:$0xff]
  %v164 = vld [vmem:[%s4 + $0x78] sm:$0xff]
  %v165 = vld [vmem:[%s4 + $0x80] sm:$0xff]
  %v166 = vld [vmem:[%s4 + $0x88] sm:$0xff]
  %v167 = vld [vmem:[%s4 + $0x90] sm:$0xff]
  %v168 = vld [vmem:[%s4 + $0x98] sm:$0xff]
  %v169 = vld [vmem:[%s4 + $0xa0] sm:$0xff]
  %v170 = vld [vmem:[%s4 + $0xa8] sm:$0xff]
  %v171 = vld [vmem:[%s4 + $0xb0] sm:$0xff]
  %v172 = vld [vmem:[%s4 + $0xb8] sm:$0xff]
  %v173 = vld [vmem:[%s4 + $0xc0] sm:$0xff]
  %v174 = vld [vmem:[%s4 + $0xc8] sm:$0xff]
  %v175 = vld [vmem:[%s4 + $0xd0] sm:$0xff]
  %v176 = vld [vmem:[%s4 + $0xd8] sm:$0xff]
  %v177 = vld [vmem:[%s4 + $0xe0] sm:$0xff]
  %v178 = vld [vmem:[%s4 + $0xe8] sm:$0xff]
  %v179 = vld [vmem:[%s4 + $0xf0] sm:$0xff]
  %v180 = vld [vmem:[%s4 + $0xf8] sm:$0xff]
  %181 = vmatprep.subr.mxu0 0.0
  %182 = vmatpush1.msra.mxu0 %v149
  %183 = vmatprep.subr.mxu0 0.0
  %184 = vmatpush1.msra.mxu0 %v150
  %185 = vmatprep.subr.mxu0 0.0
  %186 = vmatpush1.msra.mxu0 %v151
  %187 = vmatprep.subr.mxu0 0.0
  %188 = vmatpush1.msra.mxu0 %v152
  %189 = vmatprep.subr.mxu0 0.0
  %190 = vmatpush1.msra.mxu0 %v153
  %191 = vmatprep.subr.mxu0 0.0
  %192 = vmatpush1.msra.mxu0 %v154
  %193 = vmatprep.subr.mxu0 0.0
  %194 = vmatpush1.msra.mxu0 %v155
  %195 = vmatprep.subr.mxu0 0.0
  %196 = vmatpush1.msra.mxu0 %v156
  %197 = vmatprep.subr.mxu0 0.0
  %198 = vmatpush1.msra.mxu0 %v157
  %199 = vmatprep.subr.mxu0 0.0
  %200 = vmatpush1.msra.mxu0 %v158
  %201 = vmatprep.subr.mxu0 0.0
  %202 = vmatpush1.msra.mxu0 %v159
  %203 = vmatprep.subr.mxu0 0.0
  %204 = vmatpush1.msra.mxu0 %v160
  %205 = vmatprep.subr.mxu0 0.0
  %206 = vmatpush1.msra.mxu0 %v161
  %207 = vmatprep.subr.mxu0 0.0
  %208 = vmatpush1.msra.mxu0 %v162
  %209 = vmatprep.subr.mxu0 0.0
  %210 = vmatpush1.msra.mxu0 %v163
  %211 = vmatprep.subr.mxu0 0.0
  %212 = vmatpush1.msra.mxu0 %v164
  %213 = vmatprep.subr.mxu0 0.0
  %214 = vmatpush1.msra.mxu0 %v165
  %215 = vmatprep.subr.mxu0 0.0
  %216 = vmatpush1.msra.mxu0 %v166
  %217 = vmatprep.subr.mxu0 0.0
  %218 = vmatpush1.msra.mxu0 %v167
  %219 = vmatprep.subr.mxu0 0.0
  %220 = vmatpush1.msra.mxu0 %v168
  %221 = vmatprep.subr.mxu0 0.0
  %222 = vmatpush1.msra.mxu0 %v169
  %223 = vmatprep.subr.mxu0 0.0
  %224 = vmatpush1.msra.mxu0 %v170
  %225 = vmatprep.subr.mxu0 0.0
  %226 = vmatpush1.msra.mxu0 %v171
  %227 = vmatprep.subr.mxu0 0.0
  %228 = vmatpush1.msra.mxu0 %v172
  %229 = vmatprep.subr.mxu0 0.0
  %230 = vmatpush1.msra.mxu0 %v173
  %231 = vmatprep.subr.mxu0 0.0
  %232 = vmatpush1.msra.mxu0 %v174
  %233 = vmatprep.subr.mxu0 0.0
  %234 = vmatpush1.msra.mxu0 %v175
  %235 = vmatprep.subr.mxu0 0.0
  %236 = vmatpush1.msra.mxu0 %v176
  %237 = vmatprep.subr.mxu0 0.0
  %238 = vmatpush1.msra.mxu0 %v177
  %239 = vmatprep.subr.mxu0 0.0
  %240 = vmatpush1.msra.mxu0 %v178
  %241 = vmatprep.subr.mxu0 0.0
  %242 = vmatpush1.msra.mxu0 %v179
  %243 = vmatprep.subr.mxu0 0.0
  %244 = vmatpush1.msra.mxu0 %v180
  %245 = vmatprep.mubr.f32.mxu0 %v148
  %246 = vmatmul.mubr.f32.gmra.mrb[0].mxu0 %v147
  %v247 = vpop.f32.mrb[0].mxu0
  %v248 = vadd.f32 0.0, %v247
  %v249 = vpop.f32.mrb[0].mxu0
  %250 = vdwg.mxu0
  %251 = vst [vmem:[%s5] sm:$0xff] %v248
  // Predicated region
  $region22: #{cosine_topk_gate.1} parent=0 // pred_check
    _
  $region23: #{cosine_topk_gate.1} parent=0 // pred_check_branch
    %253 = sbr.rel (0) target = $region25
  $region24: #{cosine_topk_gate.1} parent=0 // pred_region
    _
  $region25: #{cosine_topk_gate.1} parent=0 // pred_fallthru
    _
  // Predicated region
  $region26: #{cosine_topk_gate.1} parent=0 // pred_check
    _
  $region27: #{cosine_topk_gate.1} parent=0 // pred_check_branch
    %255 = sbr.rel (0) target = $region29
  $region28: #{cosine_topk_gate.1} parent=0 // pred_region
    _
  $region29: #{cosine_topk_gate.1} parent=0 // pred_fallthru
    _

</llo_original>
